<compile_context>
chip_gen: v7x
topology: tpu7x:2x2x1
jax: 0.10.0
libtpu: 0.0.40
codegen_flags: <defaults>
</compile_context>

<pallas_src>
import numpy as np
import jax
import jax.numpy as jnp
from jax import lax
from jax.experimental import pallas as pl
from jax.experimental.pallas import tpu as pltpu

MM_DTYPE = jnp.bfloat16   # MXU operand dtype (accumulation is always f32)


def _ceil8(n):
    return ((n + 7) // 8) * 8


def _ceil128(n):
    return ((n + 127) // 128) * 128


def choose_batch_tile(batch, seg_len):
    """Samples folded into lanes per grid step: target ~256 lanes (v6e/v7x MXU
    width; >=128 for v5e) while keeping >=2 grid steps when the batch allows
    (v7x has two TensorCores)."""
    tb = max(1, min(32, (256 + int(seg_len) - 1) // max(int(seg_len), 1)))
    if batch <= tb:
        return max(int(batch), 1)
    return tb


def _pack_slab(mats, offs, dtype):
    rows = max(off + _ceil8(m.shape[0]) for m, off in zip(mats, offs))
    width = _ceil128(max(m.shape[1] for m in mats))
    slab = np.zeros((max(rows, 8), width), np.float32)
    for m, off in zip(mats, offs):
        slab[off:off + m.shape[0], :m.shape[1]] = m
    return jnp.asarray(slab, dtype=dtype)


# ---------------------------------------------------------------------------
# hoisted parameter re-layout (done once, outside the forward path)
# ---------------------------------------------------------------------------
def prepare_params(params, *, input_size, hidden_size, conv_kernel, pool_kernel,
                   padding, length, batch_tile):
    TB = int(batch_tile)
    nlay = len(hidden_size)

    dec_cfg = list(zip(hidden_size, conv_kernel, pool_kernel))[::-1]
    dec_rmax = [(k - 1) // s + 1 for (_, k, s) in dec_cfg]
    for _, k, s in dec_cfg:
        # TODO(synk): ConvTranspose1d with stride > kernel_size (empty
        #             polyphase phases) not implemented.
        assert s <= k, "stride > kernel_size not supported"

    w_mats, w_offs = [], []
    b_mats, b_offs = [], []

    def _add(mats, offs, m):
        m = np.asarray(m, np.float32)
        off = (offs[-1] + _ceil8(mats[-1].shape[0])) if mats else 0
        mats.append(m)
        offs.append(off)
        return (off, int(m.shape[0]), int(m.shape[1]))

    add_w = lambda m: _add(w_mats, w_offs, m)
    add_b = lambda m: _add(b_mats, b_offs, m)

    enc_meta, dec_meta = [], []
    code_meta, decout_meta = None, None
    flops = 0

    # ----------------------- encoder -----------------------
    L = int(length)
    for i in range(nlay):
        c_in = input_size if i == 0 else hidden_size[i - 1]
        c_out, K = hidden_size[i], conv_kernel[i]
        pool, pad = pool_kernel[i], padding[i]
        Lp_in = L + 2 * pad                       # per-sample padded segment
        G_in = TB * Lp_in
        n_glob = G_in - K + 1
        L_conv = Lp_in - K + 1
        L_out = L_conv // pool
        nextpad = padding[i + 1] if i + 1 < nlay else dec_rmax[0] - 1
        Lp_out = L_out + 2 * nextpad
        G_out = TB * Lp_out

        w = np.asarray(params["enc_w"][i], np.float32)      # (C_out, C_in, K)
        b = np.asarray(params["enc_b"][i], np.float32)      # (C_out,)
        wf = np.zeros((c_out, K * c_in), np.float32)        # tap-stacked conv weight
        for q in range(K):
            wf[:, q * c_in:(q + 1) * c_in] = w[:, :, q]

        # fused pool-phase selection: drops cross-sample garbage columns and
        # inserts the next layer's per-sample zero padding
        sel = np.zeros((n_glob, pool * G_out), np.float32)
        bp = np.zeros((c_out, G_out), np.float32)            # f32 bias plane
        for bb in range(TB):
            for j in range(pool):
                for t_out in range(L_out):
                    g = bb * Lp_in + t_out * pool + j
                    c = j * G_out + bb * Lp_out + nextpad + t_out
                    sel[g, c] = 1.0
            bp[:, bb * Lp_out + nextpad: bb * Lp_out + nextpad + L_out] = b[:, None]

        enc_meta.append(dict(K=K, n_glob=n_glob, pool=pool, g_out=G_out,
                             w=add_w(wf), sel=add_w(sel), bias=add_b(bp)))
        flops += 2 * c_out * (K * c_in) * n_glob
        flops += 2 * c_out * n_glob * (pool * G_out)
        if i == nlay - 1:
            code_meta = dict(C=c_out, Lp=Lp_out, pad=nextpad, L=L_out)
        L = L_out

    # ----------------------- decoder (polyphase ConvTranspose1d) -------------
    hidden_rev = hidden_size[::-1]
    for i, (c_in, K, s) in enumerate(dec_cfg):
        c_out = input_size if i == nlay - 1 else hidden_rev[i + 1]
        rmax = dec_rmax[i]
        Lp_in = L + 2 * (rmax - 1)
        G_in = TB * Lp_in
        n_glob = G_in - rmax + 1
        n_max = L + rmax - 1
        L_out = (L - 1) * s + K
        nextpad = (dec_rmax[i + 1] - 1) if i + 1 < nlay else 0
        Lp_out = L_out + 2 * nextpad
        G_out = TB * Lp_out
        rb = _ceil8(c_out)                       # 8-aligned phase row blocks

        w = np.asarray(params["dec_w"][i], np.float32)        # (C_in, C_out, K)
        b = np.asarray(params["dec_b"][i], np.float32)        # (C_out,)
        wst = np.zeros((s * rb, rmax * c_in), np.float32)     # stacked phases
        for p in range(s):
            for q in range(rmax):
                kk = p + (rmax - 1 - q) * s
                if kk < K:
                    wst[p * rb:p * rb + c_out, q * c_in:(q + 1) * c_in] = w[:, :, kk].T

        sels = []
        for p in range(s):
            S = np.zeros((n_glob, G_out), np.float32)
            for bb in range(TB):
                for m in range(n_max):
                    o = m * s + p
                    if o < L_out:
                        S[bb * Lp_in + m, bb * Lp_out + nextpad + o] = 1.0
            sels.append(add_w(S))

        bp = np.zeros((c_out, G_out), np.float32)
        for bb in range(TB):
            bp[:, bb * Lp_out + nextpad: bb * Lp_out + nextpad + L_out] = b[:, None]

        dec_meta.append(dict(rmax=rmax, n_glob=n_glob, rb=rb, C_out=c_out,
                             w=add_w(wst), sels=sels, bias=add_b(bp),
                             relu=(i != nlay - 1)))
        flops += 2 * (s * rb) * (rmax * c_in) * n_glob
        flops += 2 * s * c_out * n_glob * G_out
        if i == nlay - 1:
            decout_meta = dict(C=c_out, L=L_out)
        L = L_out

    meta = dict(TB=TB, C0=input_size, L0=int(length), pad0=padding[0],
                enc=enc_meta, dec=dec_meta, code=code_meta, dec_out=decout_meta,
                flops_step=int(flops))
    return dict(meta=meta,
                wslab=_pack_slab(w_mats, w_offs, MM_DTYPE),
                bslab=_pack_slab(b_mats, b_offs, jnp.float32))


# ---------------------------------------------------------------------------
# fused kernel: whole autoencoder, batch folded into lanes
# ---------------------------------------------------------------------------
def _make_kernel(meta):
    enc_meta, dec_meta = meta["enc"], meta["dec"]

    def kernel(x_ref, w_ref, b_ref, code_ref, out_ref):
        def loadw(d):
            return w_ref[pl.ds(d[0], d[1]), pl.ds(0, d[2])]

        def loadb(d):
            return b_ref[pl.ds(d[0], d[1]), pl.ds(0, d[2])]

        # (C0, TB*Lp0) f32: per-sample zero-padded segments, batch in lanes
        h = x_ref[0]

        # ---- encoder: Conv1d -> MaxPool1d -> ReLU (Dropout(p=0) == identity)
        act = None
        for lc in enc_meta:
            ng = lc["n_glob"]
            # tap-stacked conv: ONE bf16 MXU matmul with N = TB*length lanes
            x_stk = jnp.concatenate([h[:, q:q + ng] for q in range(lc["K"])], axis=0)
            y = jnp.dot(loadw(lc["w"]), x_stk.astype(MM_DTYPE),
                        preferred_element_type=jnp.float32)
            # fused pooling-phase select + garbage drop + next-layer padding
            psel = jnp.dot(y.astype(MM_DTYPE), loadw(lc["sel"]),
                           preferred_element_type=jnp.float32)
            g = lc["g_out"]
            pooled = psel[:, 0:g]
            for j in range(1, lc["pool"]):
                pooled = jnp.maximum(pooled, psel[:, j * g:(j + 1) * g])
            act = jnp.maximum(pooled + loadb(lc["bias"]), 0.0)   # f32 bias + ReLU
            h = act

        code_ref[0] = act

        # ---- decoder: fused polyphase ConvTranspose1d (+ ReLU except last) ---
        out = None
        for lc in dec_meta:
            ng = lc["n_glob"]
            x_stk = jnp.concatenate([h[:, q:q + ng] for q in range(lc["rmax"])],
                                    axis=0)
            y = jnp.dot(loadw(lc["w"]), x_stk.astype(MM_DTYPE),
                        preferred_element_type=jnp.float32)      # (s*rb, ng)
            yb = y.astype(MM_DTYPE)
            rb, co = lc["rb"], lc["C_out"]
            out = None
            for pi, d in enumerate(lc["sels"]):
                part = jnp.dot(yb[pi * rb:pi * rb + co, :], loadw(d),
                               preferred_element_type=jnp.float32)
                out = part if out is None else out + part
            out = out + loadb(lc["bias"])                         # f32 bias
            if lc["relu"]:
                out = jnp.maximum(out, 0.0)
            h = out

        out_ref[0] = out

    return kernel


# ---------------------------------------------------------------------------
# forward: one fused pallas_call for the whole autoencoder
# ---------------------------------------------------------------------------
def cnn_autoencoder_forward(x, prep):
    """Returns (code, decode), matching CNNAutoencoder.forward (inference)."""
    meta = prep["meta"]
    TB, C0, L0, pad0 = meta["TB"], meta["C0"], meta["L0"], meta["pad0"]
    B = x.shape[0]
    nT = -(-B // TB)
    Bp = nT * TB
    Lp0 = L0 + 2 * pad0
    G0 = TB * Lp0

    # layout plumbing (outside the kernel): fold TB samples into the lane axis
    # as contiguous zero-padded segments -> lane-dense matmuls & stores inside
    xp = x
    if Bp != B:
        xp = jnp.concatenate([xp, jnp.zeros((Bp - B, C0, L0), x.dtype)], axis=0)
    xp = xp.reshape(nT, TB, C0, L0).transpose(0, 2, 1, 3)
    xp = jnp.pad(xp, ((0, 0), (0, 0), (0, 0), (pad0, pad0))).reshape(nT, C0, G0)
    xp = xp.astype(jnp.float32)

    cc, dd = meta["code"], meta["dec_out"]
    Gc, Gd = TB * cc["Lp"], TB * dd["L"]
    wslab, bslab = prep["wslab"], prep["bslab"]

    cost = pl.CostEstimate(
        flops=int(meta["flops_step"]) * nT,
        transcendentals=0,
        bytes_accessed=int(xp.size * 4 + wslab.size * 2 + bslab.size * 4
                           + nT * (cc["C"] * Gc + dd["C"] * Gd) * 4))

    code_p, dec_p = pl.pallas_call(
        _make_kernel(meta),
        out_shape=(jax.ShapeDtypeStruct((nT, cc["C"], Gc), jnp.float32),
                   jax.ShapeDtypeStruct((nT, dd["C"], Gd), jnp.float32)),
        grid=(nT,),
        in_specs=[pl.BlockSpec((1, C0, G0), lambda t: (t, 0, 0)),
                  pl.BlockSpec(wslab.shape, lambda t: (0, 0)),
                  pl.BlockSpec(bslab.shape, lambda t: (0, 0))],
        out_specs=(pl.BlockSpec((1, cc["C"], Gc), lambda t: (t, 0, 0)),
                   pl.BlockSpec((1, dd["C"], Gd), lambda t: (t, 0, 0))),
        compiler_params=pltpu.CompilerParams(
            dimension_semantics=("parallel",),
            vmem_limit_bytes=32 * 1024 * 1024),
        cost_estimate=cost,
    )(xp, wslab, bslab)

    # unpack lane-folded outputs back to (B, C, L)
    code = code_p.reshape(nT, cc["C"], TB, cc["Lp"])[..., cc["pad"]:cc["pad"] + cc["L"]]
    code = code.transpose(0, 2, 1, 3).reshape(Bp, cc["C"], cc["L"])[:B]
    dec = dec_p.reshape(nT, dd["C"], TB, dd["L"])
    dec = dec.transpose(0, 2, 1, 3).reshape(Bp, dd["C"], dd["L"])[:B]
    return code, dec


# ---------------------------------------------------------------------------
# synthetic params (PyTorch layouts) + pure-JAX reference for validation
# ---------------------------------------------------------------------------
def init_params(key, input_size, hidden_size, conv_kernel):
    enc_w, enc_b, dec_w, dec_b = [], [], [], []
    k = key
    for i, (h, c) in enumerate(zip(hidden_size, conv_kernel)):
        s = input_size if i == 0 else hidden_size[i - 1]
        k, k1, k2 = jax.random.split(k, 3)
        enc_w.append(0.1 * jax.random.normal(k1, (h, s, c), jnp.float32))
        enc_b.append(0.1 * jax.random.normal(k2, (h,), jnp.float32))
    n = len(hidden_size)
    rev = list(zip(hidden_size, conv_kernel))[::-1]
    for i, (h, c) in enumerate(rev):
        s = input_size if i == n - 1 else hidden_size[::-1][i + 1]
        k, k1, k2 = jax.random.split(k, 3)
        dec_w.append(0.1 * jax.random.normal(k1, (h, s, c), jnp.float32))
        dec_b.append(0.1 * jax.random.normal(k2, (s,), jnp.float32))
    return {"enc_w": enc_w, "enc_b": enc_b, "dec_w": dec_w, "dec_b": dec_b}


def _reference_forward(x, params, *, conv_kernel, pool_kernel, padding):
    """Pure-JAX (XLA) reference with PyTorch semantics."""
    n = len(params["enc_w"])
    h = x
    for i in range(n):
        w, b = params["enc_w"][i], params["enc_b"][i]
        pad = padding[i]
        h = lax.conv_general_dilated(h, w, (1,), [(pad, pad)],
                                     dimension_numbers=("NCH", "OIH", "NCH"))
        h = h + b[None, :, None]
        pool = pool_kernel[i]
        lo = h.shape[-1] // pool
        h = h[:, :, :lo * pool].reshape(h.shape[0], h.shape[1], lo, pool).max(axis=-1)
        h = jnp.maximum(h, 0.0)
    code = h
    d = code
    for i, s in enumerate(pool_kernel[::-1]):
        w, b = params["dec_w"][i], params["dec_b"][i]      # (C_in, C_out, K)
        k = w.shape[2]
        w2 = jnp.transpose(jnp.flip(w, axis=2), (1, 0, 2))  # (C_out, C_in, K)
        d = lax.conv_general_dilated(d, w2, (1,), [(k - 1, k - 1)],
                                     lhs_dilation=(s,),
                                     dimension_numbers=("NCH", "OIH", "NCH"))
        d = d + b[None, :, None]
        if i != n - 1:
            d = jnp.maximum(d, 0.0)
    return code, d


if __name__ == "__main__":
    input_size = 4
    hidden_size = [8, 16]
    conv_kernel = [3, 3]
    pool_kernel = [2, 2]
    padding = [1, 1]
    B, L = 2, 16

    key = jax.random.PRNGKey(0)
    kx, kp = jax.random.split(key)
    x = jax.random.normal(kx, (B, input_size, L), jnp.float32)
    params = init_params(kp, input_size, hidden_size, conv_kernel)

    TB = choose_batch_tile(B, L + 2 * padding[0])
    prep = prepare_params(params, input_size=input_size, hidden_size=hidden_size,
                          conv_kernel=conv_kernel, pool_kernel=pool_kernel,
                          padding=padding, length=L, batch_tile=TB)

    fwd = jax.jit(lambda a: cnn_autoencoder_forward(a, prep))
    code, decode = fwd(x)
    jax.block_until_ready((code, decode))

    # encoder: 16 -pad1,conv3-> 16 -pool2-> 8 -pad1,conv3-> 8 -pool2-> 4
    assert code.shape == (B, hidden_size[-1], 4), code.shape
    # decoder: 4 -ct(k3,s2)-> 9 -ct(k3,s2)-> 19
    assert decode.shape == (B, input_size, 19), decode.shape
    assert bool(jnp.all(jnp.isfinite(code))) and bool(jnp.all(jnp.isfinite(decode)))

    # numerical check vs pure-JAX reference (bf16 MXU operands -> loose tol)
    code_ref, dec_ref = _reference_forward(
        x, params, conv_kernel=conv_kernel, pool_kernel=pool_kernel, padding=padding)
    assert bool(jnp.allclose(code, code_ref, rtol=5e-2, atol=2e-2)), \
        float(jnp.max(jnp.abs(code - code_ref)))
    assert bool(jnp.allclose(decode, dec_ref, rtol=5e-2, atol=2e-2)), \
        float(jnp.max(jnp.abs(decode - dec_ref)))

    print("KERNEL_OK")
</pallas_src>

<mosaic_0001>
module attributes {stable_mosaic.version = 11 : i64} {
  func.func @kernel(%arg0: i32, %arg1: memref<1x4x36xf32, #tpu.memory_space<vmem>>, %arg2: memref<200x128xbf16, #tpu.memory_space<vmem>>, %arg3: memref<40x128xf32, #tpu.memory_space<vmem>>, %arg4: memref<1x16x12xf32, #tpu.memory_space<vmem>>, %arg5: memref<1x4x38xf32, #tpu.memory_space<vmem>>) attributes {dimension_semantics = [#tpu.dimension_semantics<parallel>], iteration_bounds = array<i64: 1>, scalar_prefetch = 0 : i64, scratch_operands = 0 : i64, tpu.core_type = #tpu.core_type<tc>, window_params = [{transform_indices = @transform_0, window_bounds = array<i64: 1, 4, 36>}, {pipeline_mode = #tpu.pipeline_mode<synchronous>, transform_indices = @transform_1, window_bounds = array<i64: 200, 128>}, {pipeline_mode = #tpu.pipeline_mode<synchronous>, transform_indices = @transform_2, window_bounds = array<i64: 40, 128>}, {transform_indices = @transform_3, window_bounds = array<i64: 1, 16, 12>}, {transform_indices = @transform_4, window_bounds = array<i64: 1, 4, 38>}]} {
    %c0 = arith.constant 0 : index
    %c0_0 = arith.constant 0 : index
    %c0_1 = arith.constant 0 : index
    %0 = vector.load %arg1[%c0, %c0_0, %c0_1] : memref<1x4x36xf32, #tpu.memory_space<vmem>>, vector<1x4x36xf32>
    %1 = vector.shape_cast %0 : vector<1x4x36xf32> to vector<4x36xf32>
    %2 = vector.extract_strided_slice %1 {offsets = [0, 0], sizes = [4, 34], strides = [1, 1]} : vector<4x36xf32> to vector<4x34xf32>
    %3 = vector.extract_strided_slice %1 {offsets = [0, 1], sizes = [4, 34], strides = [1, 1]} : vector<4x36xf32> to vector<4x34xf32>
    %4 = vector.extract_strided_slice %1 {offsets = [0, 2], sizes = [4, 34], strides = [1, 1]} : vector<4x36xf32> to vector<4x34xf32>
    %5 = tpu.concatenate %2, %3, %4 in 0 : vector<4x34xf32>, vector<4x34xf32>, vector<4x34xf32> -> vector<12x34xf32>
    %c0_2 = arith.constant 0 : index
    %c0_3 = arith.constant 0 : index
    %6 = vector.load %arg2[%c0_2, %c0_3] : memref<200x128xbf16, #tpu.memory_space<vmem>>, vector<8x12xbf16>
    %7 = arith.truncf %5 : vector<12x34xf32> to vector<12x34xbf16>
    %cst = arith.constant dense<0.000000e+00> : vector<8x34xf32>
    %8 = tpu.matmul %6, %7, %cst {dimension_numbers = #tpu.dot_dimension_numbers<[1], [0], [0], [1], [0, 0, 1, 1], [], []>} : vector<8x12xbf16>, vector<12x34xbf16>, vector<8x34xf32> -> vector<8x34xf32>
    %9 = arith.truncf %8 : vector<8x34xf32> to vector<8x34xbf16>
    %c8 = arith.constant 8 : index
    %c0_4 = arith.constant 0 : index
    %10 = vector.load %arg2[%c8, %c0_4] : memref<200x128xbf16, #tpu.memory_space<vmem>>, vector<34x40xbf16>
    %cst_5 = arith.constant dense<0.000000e+00> : vector<8x40xf32>
    %11 = tpu.matmul %9, %10, %cst_5 {dimension_numbers = #tpu.dot_dimension_numbers<[1], [0], [0], [1], [0, 0, 1, 1], [], []>} : vector<8x34xbf16>, vector<34x40xbf16>, vector<8x40xf32> -> vector<8x40xf32>
    %12 = vector.extract_strided_slice %11 {offsets = [0, 0], sizes = [8, 20], strides = [1, 1]} : vector<8x40xf32> to vector<8x20xf32>
    %13 = vector.extract_strided_slice %11 {offsets = [0, 20], sizes = [8, 20], strides = [1, 1]} : vector<8x40xf32> to vector<8x20xf32>
    %14 = arith.maximumf %12, %13 : vector<8x20xf32>
    %c0_6 = arith.constant 0 : index
    %c0_7 = arith.constant 0 : index
    %15 = vector.load %arg3[%c0_6, %c0_7] : memref<40x128xf32, #tpu.memory_space<vmem>>, vector<8x20xf32>
    %16 = arith.addf %14, %15 : vector<8x20xf32>
    %cst_8 = arith.constant 0.000000e+00 : f32
    %17 = vector.broadcast %cst_8 : f32 to vector<8x20xf32>
    %18 = arith.maximumf %16, %17 : vector<8x20xf32>
    %19 = vector.extract_strided_slice %18 {offsets = [0, 0], sizes = [8, 18], strides = [1, 1]} : vector<8x20xf32> to vector<8x18xf32>
    %20 = vector.extract_strided_slice %18 {offsets = [0, 1], sizes = [8, 18], strides = [1, 1]} : vector<8x20xf32> to vector<8x18xf32>
    %21 = vector.extract_strided_slice %18 {offsets = [0, 2], sizes = [8, 18], strides = [1, 1]} : vector<8x20xf32> to vector<8x18xf32>
    %22 = tpu.concatenate %19, %20, %21 in 0 : vector<8x18xf32>, vector<8x18xf32>, vector<8x18xf32> -> vector<24x18xf32>
    %c48 = arith.constant 48 : index
    %c0_9 = arith.constant 0 : index
    %23 = vector.load %arg2[%c48, %c0_9] : memref<200x128xbf16, #tpu.memory_space<vmem>>, vector<16x24xbf16>
    %24 = arith.truncf %22 : vector<24x18xf32> to vector<24x18xbf16>
    %cst_10 = arith.constant dense<0.000000e+00> : vector<16x18xf32>
    %25 = tpu.matmul %23, %24, %cst_10 {dimension_numbers = #tpu.dot_dimension_numbers<[1], [0], [0], [1], [0, 0, 1, 1], [], []>} : vector<16x24xbf16>, vector<24x18xbf16>, vector<16x18xf32> -> vector<16x18xf32>
    %26 = arith.truncf %25 : vector<16x18xf32> to vector<16x18xbf16>
    %c64 = arith.constant 64 : index
    %c0_11 = arith.constant 0 : index
    %27 = vector.load %arg2[%c64, %c0_11] : memref<200x128xbf16, #tpu.memory_space<vmem>>, vector<18x24xbf16>
    %cst_12 = arith.constant dense<0.000000e+00> : vector<16x24xf32>
    %28 = tpu.matmul %26, %27, %cst_12 {dimension_numbers = #tpu.dot_dimension_numbers<[1], [0], [0], [1], [0, 0, 1, 1], [], []>} : vector<16x18xbf16>, vector<18x24xbf16>, vector<16x24xf32> -> vector<16x24xf32>
    %29 = vector.extract_strided_slice %28 {offsets = [0, 0], sizes = [16, 12], strides = [1, 1]} : vector<16x24xf32> to vector<16x12xf32>
    %30 = vector.extract_strided_slice %28 {offsets = [0, 12], sizes = [16, 12], strides = [1, 1]} : vector<16x24xf32> to vector<16x12xf32>
    %31 = arith.maximumf %29, %30 : vector<16x12xf32>
    %c8_13 = arith.constant 8 : index
    %c0_14 = arith.constant 0 : index
    %32 = vector.load %arg3[%c8_13, %c0_14] : memref<40x128xf32, #tpu.memory_space<vmem>>, vector<16x12xf32>
    %33 = arith.addf %31, %32 : vector<16x12xf32>
    %cst_15 = arith.constant 0.000000e+00 : f32
    %34 = vector.broadcast %cst_15 : f32 to vector<16x12xf32>
    %35 = arith.maximumf %33, %34 : vector<16x12xf32>
    %c0_16 = arith.constant 0 : index
    %c0_17 = arith.constant 0 : index
    %c0_18 = arith.constant 0 : index
    %36 = vector.load %arg4[%c0_16, %c0_17, %c0_18] : memref<1x16x12xf32, #tpu.memory_space<vmem>>, vector<1x16x12xf32>
    %37 = vector.shape_cast %36 : vector<1x16x12xf32> to vector<16x12xf32>
    %38 = vector.shape_cast %35 : vector<16x12xf32> to vector<1x16x12xf32>
    tpu.vector_store %arg4[%c0_16, %c0_17, %c0_18], %38 {strides = array<i32>} : memref<1x16x12xf32, #tpu.memory_space<vmem>>, vector<1x16x12xf32>,
    %39 = vector.extract_strided_slice %35 {offsets = [0, 0], sizes = [16, 11], strides = [1, 1]} : vector<16x12xf32> to vector<16x11xf32>
    %40 = vector.extract_strided_slice %35 {offsets = [0, 1], sizes = [16, 11], strides = [1, 1]} : vector<16x12xf32> to vector<16x11xf32>
    %41 = tpu.concatenate %39, %40 in 0 : vector<16x11xf32>, vector<16x11xf32> -> vector<32x11xf32>
    %c120 = arith.constant 120 : index
    %c0_19 = arith.constant 0 : index
    %42 = vector.load %arg2[%c120, %c0_19] : memref<200x128xbf16, #tpu.memory_space<vmem>>, vector<16x32xbf16>
    %43 = arith.truncf %41 : vector<32x11xf32> to vector<32x11xbf16>
    %cst_20 = arith.constant dense<0.000000e+00> : vector<16x11xf32>
    %44 = tpu.matmul %42, %43, %cst_20 {dimension_numbers = #tpu.dot_dimension_numbers<[1], [0], [0], [1], [0, 0, 1, 1], [], []>} : vector<16x32xbf16>, vector<32x11xbf16>, vector<16x11xf32> -> vector<16x11xf32>
    %45 = arith.truncf %44 : vector<16x11xf32> to vector<16x11xbf16>
    %46 = vector.extract_strided_slice %45 {offsets = [0, 0], sizes = [8, 11], strides = [1, 1]} : vector<16x11xbf16> to vector<8x11xbf16>
    %c88 = arith.constant 88 : index
    %c0_21 = arith.constant 0 : index
    %47 = vector.load %arg2[%c88, %c0_21] : memref<200x128xbf16, #tpu.memory_space<vmem>>, vector<11x22xbf16>
    %cst_22 = arith.constant dense<0.000000e+00> : vector<8x22xf32>
    %48 = tpu.matmul %46, %47, %cst_22 {dimension_numbers = #tpu.dot_dimension_numbers<[1], [0], [0], [1], [0, 0, 1, 1], [], []>} : vector<8x11xbf16>, vector<11x22xbf16>, vector<8x22xf32> -> vector<8x22xf32>
    %49 = vector.extract_strided_slice %45 {offsets = [8, 0], sizes = [8, 11], strides = [1, 1]} : vector<16x11xbf16> to vector<8x11xbf16>
    %c104 = arith.constant 104 : index
    %c0_23 = arith.constant 0 : index
    %50 = vector.load %arg2[%c104, %c0_23] : memref<200x128xbf16, #tpu.memory_space<vmem>>, vector<11x22xbf16>
    %cst_24 = arith.constant dense<0.000000e+00> : vector<8x22xf32>
    %51 = tpu.matmul %49, %50, %cst_24 {dimension_numbers = #tpu.dot_dimension_numbers<[1], [0], [0], [1], [0, 0, 1, 1], [], []>} : vector<8x11xbf16>, vector<11x22xbf16>, vector<8x22xf32> -> vector<8x22xf32>
    %52 = arith.addf %48, %51 : vector<8x22xf32>
    %c24 = arith.constant 24 : index
    %c0_25 = arith.constant 0 : index
    %53 = vector.load %arg3[%c24, %c0_25] : memref<40x128xf32, #tpu.memory_space<vmem>>, vector<8x22xf32>
    %54 = arith.addf %52, %53 : vector<8x22xf32>
    %cst_26 = arith.constant 0.000000e+00 : f32
    %55 = vector.broadcast %cst_26 : f32 to vector<8x22xf32>
    %56 = arith.maximumf %54, %55 : vector<8x22xf32>
    %57 = vector.extract_strided_slice %56 {offsets = [0, 0], sizes = [8, 21], strides = [1, 1]} : vector<8x22xf32> to vector<8x21xf32>
    %58 = vector.extract_strided_slice %56 {offsets = [0, 1], sizes = [8, 21], strides = [1, 1]} : vector<8x22xf32> to vector<8x21xf32>
    %59 = tpu.concatenate %57, %58 in 0 : vector<8x21xf32>, vector<8x21xf32> -> vector<16x21xf32>
    %c184 = arith.constant 184 : index
    %c0_27 = arith.constant 0 : index
    %60 = vector.load %arg2[%c184, %c0_27] : memref<200x128xbf16, #tpu.memory_space<vmem>>, vector<16x16xbf16>
    %61 = arith.truncf %59 : vector<16x21xf32> to vector<16x21xbf16>
    %cst_28 = arith.constant dense<0.000000e+00> : vector<16x21xf32>
    %62 = tpu.matmul %60, %61, %cst_28 {dimension_numbers = #tpu.dot_dimension_numbers<[1], [0], [0], [1], [0, 0, 1, 1], [], []>} : vector<16x16xbf16>, vector<16x21xbf16>, vector<16x21xf32> -> vector<16x21xf32>
    %63 = arith.truncf %62 : vector<16x21xf32> to vector<16x21xbf16>
    %64 = vector.extract_strided_slice %63 {offsets = [0, 0], sizes = [4, 21], strides = [1, 1]} : vector<16x21xbf16> to vector<4x21xbf16>
    %c136 = arith.constant 136 : index
    %c0_29 = arith.constant 0 : index
    %65 = vector.load %arg2[%c136, %c0_29] : memref<200x128xbf16, #tpu.memory_space<vmem>>, vector<21x38xbf16>
    %cst_30 = arith.constant dense<0.000000e+00> : vector<4x38xf32>
    %66 = tpu.matmul %64, %65, %cst_30 {dimension_numbers = #tpu.dot_dimension_numbers<[1], [0], [0], [1], [0, 0, 1, 1], [], []>} : vector<4x21xbf16>, vector<21x38xbf16>, vector<4x38xf32> -> vector<4x38xf32>
    %67 = vector.extract_strided_slice %63 {offsets = [8, 0], sizes = [4, 21], strides = [1, 1]} : vector<16x21xbf16> to vector<4x21xbf16>
    %c160 = arith.constant 160 : index
    %c0_31 = arith.constant 0 : index
    %68 = vector.load %arg2[%c160, %c0_31] : memref<200x128xbf16, #tpu.memory_space<vmem>>, vector<21x38xbf16>
    %cst_32 = arith.constant dense<0.000000e+00> : vector<4x38xf32>
    %69 = tpu.matmul %67, %68, %cst_32 {dimension_numbers = #tpu.dot_dimension_numbers<[1], [0], [0], [1], [0, 0, 1, 1], [], []>} : vector<4x21xbf16>, vector<21x38xbf16>, vector<4x38xf32> -> vector<4x38xf32>
    %70 = arith.addf %66, %69 : vector<4x38xf32>
    %c32 = arith.constant 32 : index
    %c0_33 = arith.constant 0 : index
    %71 = vector.load %arg3[%c32, %c0_33] : memref<40x128xf32, #tpu.memory_space<vmem>>, vector<4x38xf32>
    %72 = arith.addf %70, %71 : vector<4x38xf32>
    %c0_34 = arith.constant 0 : index
    %c0_35 = arith.constant 0 : index
    %c0_36 = arith.constant 0 : index
    %73 = vector.load %arg5[%c0_34, %c0_35, %c0_36] : memref<1x4x38xf32, #tpu.memory_space<vmem>>, vector<1x4x38xf32>
    %74 = vector.shape_cast %73 : vector<1x4x38xf32> to vector<4x38xf32>
    %75 = vector.shape_cast %72 : vector<4x38xf32> to vector<1x4x38xf32>
    tpu.vector_store %arg5[%c0_34, %c0_35, %c0_36], %75 {strides = array<i32>} : memref<1x4x38xf32, #tpu.memory_space<vmem>>, vector<1x4x38xf32>,
    return
  }
  func.func @transform_0(%arg0: i32) -> (i32, i32, i32) {
    %c0_i32 = arith.constant 0 : i32
    %c0_i32_0 = arith.constant 0 : i32
    %c0_i32_1 = arith.constant 0 : i32
    return %arg0, %c0_i32, %c0_i32_0 : i32, i32, i32
  }
  func.func @transform_1(%arg0: i32) -> (i32, i32) {
    %c0_i32 = arith.constant 0 : i32
    %c0_i32_0 = arith.constant 0 : i32
    %c0_i32_1 = arith.constant 0 : i32
    return %c0_i32, %c0_i32_0 : i32, i32
  }
  func.func @transform_2(%arg0: i32) -> (i32, i32) {
    %c0_i32 = arith.constant 0 : i32
    %c0_i32_0 = arith.constant 0 : i32
    %c0_i32_1 = arith.constant 0 : i32
    return %c0_i32, %c0_i32_0 : i32, i32
  }
  func.func @transform_3(%arg0: i32) -> (i32, i32, i32) {
    %c0_i32 = arith.constant 0 : i32
    %c0_i32_0 = arith.constant 0 : i32
    %c0_i32_1 = arith.constant 0 : i32
    return %arg0, %c0_i32, %c0_i32_0 : i32, i32, i32
  }
  func.func @transform_4(%arg0: i32) -> (i32, i32, i32) {
    %c0_i32 = arith.constant 0 : i32
    %c0_i32_0 = arith.constant 0 : i32
    %c0_i32_1 = arith.constant 0 : i32
    return %arg0, %c0_i32, %c0_i32_0 : i32, i32, i32
  }
}

</mosaic_0001>

<llo_original>
// kernel: _lambda_.1
$region0: #{_lambda_.1}
  #allocation0 [shape = 'u32[]', space=smem, size = 0x4, offset = 0x4, fixed_abs, tag = 'smem constant byte address 0x4 - core index']
  #allocation1 [shape = 'u32[144,128]{1,0:T(1,128)}', space=vmem, size = 0x12000, scoped, tag = 'internal scratch']
  %s0 = inlined_call_operand.vmem [shape: f32[1,4,36], index: 0, kind: input, shape index: {}]
  %s1 = inlined_call_operand.hbm [shape: bf16[200,128], index: 1, kind: input, shape index: {}]
  %s2 = inlined_call_operand.vmem [shape: f32[40,128], index: 2, kind: input, shape index: {}]
  %s3 = inlined_call_operand.vmem [shape: f32[1,16,12], index: 3, kind: output, shape index: {0}]
  %s4 = inlined_call_operand.vmem [shape: f32[1,4,38], index: 4, kind: output, shape index: {1}]
  %5 = xla_tuple %s3, %s4
  %s6 = sld [smem:[#allocation0]]
  $region34: #{_lambda_.1} parent=0
    _
  %s8 = ssub.s32 1, %s6
  %s9 = scalar_select 0, %s8, %s6
  $region1: #{_lambda_.1} parent=0
    #allocation2 [shape = 'u8[51200]{0}', space=vmem, size = 0xc800, scoped, tag = 'input window, operand 1, single buffered']
    #allocation3 [shape = 's32[1]{0}', space=sflag, size = 0x4, scoped, tag = 'scoped memory for _lambda_.1']
    %10 = vsyncpa [#allocation3], 0
    // Predicated region
    $region2: #{_lambda_.1} parent=1 // pred_check
      _
    $region3: #{_lambda_.1} parent=1 // pred_check_branch
      %12 = sbr.rel (0) target = $region5
    $region4: #{_lambda_.1} parent=1 // pred_region
      _
    $region5: #{_lambda_.1} parent=1 // pred_fallthru
      _
    // Predicated region
    $region6: #{_lambda_.1} parent=1 // pred_check
      _
    $region7: #{_lambda_.1} parent=1 // pred_check_branch
      %14 = sbr.rel (0) target = $region9
    $region8: #{_lambda_.1} parent=1 // pred_region
      %s16 = ssub.s32 1600, 1600
      %17 = vsyncadd [#allocation3], %s16
      %s18 = sshll.u32 [#allocation2], 4
      %s19 = int_to_ptr.vmem [resolvable:$true] %s18
      %24 = dma.hbm_to_vmem [thread:$0]  %s1, 1600, %s19, [#allocation3], 64, 64, 4
    $region9: #{_lambda_.1} parent=1 // pred_fallthru
      _
    // Predicated region
    $region10: #{_lambda_.1} parent=1 // pred_check
      _
    $region11: #{_lambda_.1} parent=1 // pred_check_branch
      %26 = sbr.rel (0) target = $region13
    $region12: #{_lambda_.1} parent=1 // pred_region
      _
    $region13: #{_lambda_.1} parent=1 // pred_fallthru
      _
    // Predicated region
    $region14: #{_lambda_.1} parent=1 // pred_check
      _
    $region15: #{_lambda_.1} parent=1 // pred_check_branch
      %28 = sbr.rel (0) target = $region17
    $region16: #{_lambda_.1} parent=1 // pred_region
      %29 = dma.done [#allocation3], 1600
    $region17: #{_lambda_.1} parent=1 // pred_fallthru
      _
    %v31 = vld [vmem:[%s0] sm:$0xf]
    %v33 = vrot.slane %v31, 4
    %34 = vrot.lane.b32.xlu0 %v33, 127
    %v35 = vpop.permute.xlu0 %34
    %37 = vrot.lane.b32.xlu0 %v31, 126
    %v38 = vpop.permute.xlu0 %37
    %vm40 = vcmask 1043456
    %v41 = vsel %vm40, %v31, %v35
    %v42 = vld [vmem:[#allocation2] sm:$0xf]
    %v43 = vpack.c.bf16 %v38, %v41
    %vm44 = vcmask 97280
    %v46 = vsel %vm44, %v42, 0
    %vm48 = vcmask 1045504
    %v50 = vsel %vm48, %v43, 0
    %52 = vmatprep.subr.bf16.mxu0 0
    %53 = vmatpush1.bf16.msra.mxu0 %v50
    %54 = vmatprep.subr.bf16.mxu0 0
    %55 = vmatpush1.bf16.msra.mxu0 0
    %56 = vmatprep.subr.bf16.mxu0 0
    %57 = vmatpush1.bf16.msra.mxu0 0
    %58 = vmatprep.subr.bf16.mxu0 0
    %59 = vmatpush1.bf16.msra.mxu0 0
    %60 = vmatprep.subr.bf16.mxu0 0
    %61 = vmatpush1.bf16.msra.mxu0 0
    %62 = vmatprep.subr.bf16.mxu0 0
    %63 = vmatpush1.bf16.msra.mxu0 0
    %64 = vmatprep.subr.bf16.mxu0 0
    %65 = vmatpush1.bf16.msra.mxu0 0
    %66 = vmatprep.subr.bf16.mxu0 0
    %67 = vmatpush1.bf16.msra.mxu0 0
    %68 = vmatprep.subr.bf16.mxu0 0
    %69 = vmatpush1.bf16.msra.mxu0 0
    %70 = vmatprep.subr.bf16.mxu0 0
    %71 = vmatpush1.bf16.msra.mxu0 0
    %72 = vmatprep.subr.bf16.mxu0 0
    %73 = vmatpush1.bf16.msra.mxu0 0
    %74 = vmatprep.subr.bf16.mxu0 0
    %75 = vmatpush1.bf16.msra.mxu0 0
    %76 = vmatprep.subr.bf16.mxu0 0
    %77 = vmatpush1.bf16.msra.mxu0 0
    %78 = vmatprep.subr.bf16.mxu0 0
    %79 = vmatpush1.bf16.msra.mxu0 0
    %80 = vmatprep.subr.bf16.mxu0 0
    %81 = vmatpush1.bf16.msra.mxu0 0
    %82 = vmatprep.subr.bf16.mxu0 0
    %83 = vmatpush1.bf16.msra.mxu0 0
    %84 = vmatprep.mubr.bf16.mxu0 0
    %85 = vmatmul.mubr.bf16.gmra.mrb[0].mxu0 %v46
    %v86 = vpop.f32.mrb[0].mxu0
    %v87 = vadd.f32 0.0, %v86
    %v88 = vpop.f32.mrb[0].mxu0
    %v89 = vpop.f32.mrb[0].mxu0
    %v90 = vpop.f32.mrb[0].mxu0
    %91 = vdwg.mxu0
    %v92 = vpack.c.bf16 %v87, %v87
    %v93 = vld [vmem:[#allocation2 + $0x4] sm:$0xf]
    %v94 = vld [vmem:[#allocation2 + $0x8] sm:$0xf]
    %v95 = vld [vmem:[#allocation2 + $0xc] sm:$0xf]
    %v96 = vld [vmem:[#allocation2 + $0x10] sm:$0xf]
    %v97 = vld [vmem:[#allocation2 + $0x14] sm:$0x1]
    %v103 = vunpack.c.l.b16 %v93
    %v104 = vunpack.c.l.b16 %v94
    %v105 = vunpack.c.l.b16 %v95
    %v106 = vunpack.c.l.b16 %v96
    %v107 = vunpack.c.l.b16 %v97
    %v108 = vpack.c.b16 %v104, %v103
    %v109 = vpack.c.b16 %v106, %v105
    %v110 = vpack.c.b16 %v107, %v107
    %vm113 = vcmask 277504
    %v115 = vsel %vm113, %v92, 0
    %vm117 = vcmask 1040384
    %v119 = vsel %vm117, %v110, 0
    %121 = vmatprep.subr.bf16.mxu0 0
    %122 = vmatpush1.bf16.msra.mxu0 %v108
    %123 = vmatprep.subr.bf16.mxu0 0
    %124 = vmatpush1.bf16.msra.mxu0 %v109
    %125 = vmatprep.subr.bf16.mxu0 0
    %126 = vmatpush1.bf16.msra.mxu0 %v119
    %127 = vmatprep.subr.bf16.mxu0 0
    %128 = vmatpush1.bf16.msra.mxu0 0
    %129 = vmatprep.subr.bf16.mxu0 0
    %130 = vmatpush1.bf16.msra.mxu0 0
    %131 = vmatprep.subr.bf16.mxu0 0
    %132 = vmatpush1.bf16.msra.mxu0 0
    %133 = vmatprep.subr.bf16.mxu0 0
    %134 = vmatpush1.bf16.msra.mxu0 0
    %135 = vmatprep.subr.bf16.mxu0 0
    %136 = vmatpush1.bf16.msra.mxu0 0
    %137 = vmatprep.subr.bf16.mxu0 0
    %138 = vmatpush1.bf16.msra.mxu0 0
    %139 = vmatprep.subr.bf16.mxu0 0
    %140 = vmatpush1.bf16.msra.mxu0 0
    %141 = vmatprep.subr.bf16.mxu0 0
    %142 = vmatpush1.bf16.msra.mxu0 0
    %143 = vmatprep.subr.bf16.mxu0 0
    %144 = vmatpush1.bf16.msra.mxu0 0
    %145 = vmatprep.subr.bf16.mxu0 0
    %146 = vmatpush1.bf16.msra.mxu0 0
    %147 = vmatprep.subr.bf16.mxu0 0
    %148 = vmatpush1.bf16.msra.mxu0 0
    %149 = vmatprep.subr.bf16.mxu0 0
    %150 = vmatpush1.bf16.msra.mxu0 0
    %151 = vmatprep.subr.bf16.mxu0 0
    %152 = vmatpush1.bf16.msra.mxu0 0
    %153 = vmatprep.mubr.bf16.mxu0 0
    %154 = vmatmul.mubr.bf16.gmra.mrb[0].mxu0 %v115
    %v155 = vpop.f32.mrb[0].mxu0
    %v156 = vadd.f32 0.0, %v155
    %v157 = vpop.f32.mrb[0].mxu0
    %v158 = vpop.f32.mrb[0].mxu0
    %v159 = vpop.f32.mrb[0].mxu0
    %160 = vdwg.mxu0
    %162 = vrot.lane.b32.xlu0 %v156, 108
    %v163 = vpop.permute.xlu0 %162
    %v165 = vmax.f32 %v156, %v163
    %v166 = vld [vmem:[%s2] sm:$0xff]
    %v167 = vadd.f32 %v165, %v166
    %v168 = vmax.f32 %v167, 0.0
    %170 = vrot.lane.b32.xlu0 %v168, 127
    %v171 = vpop.permute.xlu0 %170
    %173 = vrot.lane.b32.xlu0 %v168, 126
    %v174 = vpop.permute.xlu0 %173
    %v176 = vld [vmem:[#allocation2 + $0x18] sm:$0xf]
    %v177 = vld [vmem:[#allocation2 + $0x1c] sm:$0xf]
    %v178 = vpack.c.bf16 %v171, %v168
    %v179 = vpack.c.bf16 %v174, %v174
    %v182 = vunpack.c.l.b16 %v176
    %v183 = vunpack.c.l.b16 %v177
    %v184 = vpack.c.b16 %v183, %v182
    %vm185 = vcmask 195584
    %v187 = vsel %vm185, %v184, 0
    %v190 = vsel %vm40, %v179, 0
    %192 = vmatprep.subr.bf16.mxu0 0
    %193 = vmatpush1.bf16.msra.mxu0 %v178
    %194 = vmatprep.subr.bf16.mxu0 0
    %195 = vmatpush1.bf16.msra.mxu0 %v190
    %196 = vmatprep.subr.bf16.mxu0 0
    %197 = vmatpush1.bf16.msra.mxu0 0
    %198 = vmatprep.subr.bf16.mxu0 0
    %199 = vmatpush1.bf16.msra.mxu0 0
    %200 = vmatprep.subr.bf16.mxu0 0
    %201 = vmatpush1.bf16.msra.mxu0 0
    %202 = vmatprep.subr.bf16.mxu0 0
    %203 = vmatpush1.bf16.msra.mxu0 0
    %204 = vmatprep.subr.bf16.mxu0 0
    %205 = vmatpush1.bf16.msra.mxu0 0
    %206 = vmatprep.subr.bf16.mxu0 0
    %207 = vmatpush1.bf16.msra.mxu0 0
    %208 = vmatprep.subr.bf16.mxu0 0
    %209 = vmatpush1.bf16.msra.mxu0 0
    %210 = vmatprep.subr.bf16.mxu0 0
    %211 = vmatpush1.bf16.msra.mxu0 0
    %212 = vmatprep.subr.bf16.mxu0 0
    %213 = vmatpush1.bf16.msra.mxu0 0
    %214 = vmatprep.subr.bf16.mxu0 0
    %215 = vmatpush1.bf16.msra.mxu0 0
    %216 = vmatprep.subr.bf16.mxu0 0
    %217 = vmatpush1.bf16.msra.mxu0 0
    %218 = vmatprep.subr.bf16.mxu0 0
    %219 = vmatpush1.bf16.msra.mxu0 0
    %220 = vmatprep.subr.bf16.mxu0 0
    %221 = vmatpush1.bf16.msra.mxu0 0
    %222 = vmatprep.subr.bf16.mxu0 0
    %223 = vmatpush1.bf16.msra.mxu0 0
    %224 = vmatprep.mubr.bf16.mxu0 0
    %225 = vmatmul.mubr.bf16.gmra.mrb[0].mxu0 %v187
    %v226 = vpop.f32.mrb[0].mxu0
    %v227 = vadd.f32 0.0, %v226
    %v228 = vpop.f32.mrb[0].mxu0
    %v229 = vpop.f32.mrb[0].mxu0
    %v230 = vadd.f32 0.0, %v229
    %v231 = vpop.f32.mrb[0].mxu0
    %232 = vdwg.mxu0
    %v233 = vpack.c.bf16 %v230, %v227
    %v234 = vld [vmem:[#allocation2 + $0x20] sm:$0xf]
    %v235 = vld [vmem:[#allocation2 + $0x24] sm:$0xf]
    %v236 = vld [vmem:[#allocation2 + $0x28] sm:$0x1]
    %v240 = vunpack.c.l.b16 %v234
    %v241 = vunpack.c.l.b16 %v235
    %v242 = vunpack.c.l.b16 %v236
    %v243 = vpack.c.b16 %v241, %v240
    %v244 = vpack.c.b16 %v242, %v242
    %vm246 = vcmask 146432
    %v248 = vsel %vm246, %v233, 0
    %v251 = vsel %vm117, %v244, 0
    %253 = vmatprep.subr.bf16.mxu0 0
    %254 = vmatpush1.bf16.msra.mxu0 %v243
    %255 = vmatprep.subr.bf16.mxu0 0
    %256 = vmatpush1.bf16.msra.mxu0 %v251
    %257 = vmatprep.subr.bf16.mxu0 0
    %258 = vmatpush1.bf16.msra.mxu0 0
    %259 = vmatprep.subr.bf16.mxu0 0
    %260 = vmatpush1.bf16.msra.mxu0 0
    %261 = vmatprep.subr.bf16.mxu0 0
    %262 = vmatpush1.bf16.msra.mxu0 0
    %263 = vmatprep.subr.bf16.mxu0 0
    %264 = vmatpush1.bf16.msra.mxu0 0
    %265 = vmatprep.subr.bf16.mxu0 0
    %266 = vmatpush1.bf16.msra.mxu0 0
    %267 = vmatprep.subr.bf16.mxu0 0
    %268 = vmatpush1.bf16.msra.mxu0 0
    %269 = vmatprep.subr.bf16.mxu0 0
    %270 = vmatpush1.bf16.msra.mxu0 0
    %271 = vmatprep.subr.bf16.mxu0 0
    %272 = vmatpush1.bf16.msra.mxu0 0
    %273 = vmatprep.subr.bf16.mxu0 0
    %274 = vmatpush1.bf16.msra.mxu0 0
    %275 = vmatprep.subr.bf16.mxu0 0
    %276 = vmatpush1.bf16.msra.mxu0 0
    %277 = vmatprep.subr.bf16.mxu0 0
    %278 = vmatpush1.bf16.msra.mxu0 0
    %279 = vmatprep.subr.bf16.mxu0 0
    %280 = vmatpush1.bf16.msra.mxu0 0
    %281 = vmatprep.subr.bf16.mxu0 0
    %282 = vmatpush1.bf16.msra.mxu0 0
    %283 = vmatprep.subr.bf16.mxu0 0
    %284 = vmatpush1.bf16.msra.mxu0 0
    %285 = vmatprep.mubr.bf16.mxu0 0
    %286 = vmatmul.mubr.bf16.gmra.mrb[0].mxu0 %v248
    %v287 = vpop.f32.mrb[0].mxu0
    %v288 = vadd.f32 0.0, %v287
    %v289 = vpop.f32.mrb[0].mxu0
    %v290 = vpop.f32.mrb[0].mxu0
    %v291 = vadd.f32 0.0, %v290
    %v292 = vpop.f32.mrb[0].mxu0
    %293 = vdwg.mxu0
    %296 = vrot.lane.b32.xlu0 %v288, 116
    %v297 = vpop.permute.xlu0 %296
    %298 = vrot.lane.b32.xlu0 %v291, 116
    %v299 = vpop.permute.xlu0 %298
    %v302 = vmax.f32 %v288, %v297
    %v303 = vmax.f32 %v291, %v299
    %v304 = vld [vmem:[%s2 + $0x8] sm:$0xff]
    %v305 = vld [vmem:[%s2 + $0x10] sm:$0xff]
    %v306 = vadd.f32 %v302, %v304
    %v307 = vadd.f32 %v303, %v305
    %v308 = vmax.f32 %v306, 0.0
    %v309 = vmax.f32 %v307, 0.0
    %310 = vst.msk [vmem:[%s3] sm:$0xff] %vm44, %v308
    %311 = vst.msk [vmem:[%s3 + $0x8] sm:$0xff] %vm44, %v309
    %314 = vrot.lane.b32.xlu0 %v308, 127
    %v315 = vpop.permute.xlu0 %314
    %316 = vrot.lane.b32.xlu0 %v309, 127
    %v317 = vpop.permute.xlu0 %316
    %v320 = vld [vmem:[#allocation2 + $0x3c] sm:$0xf]
    %v321 = vld [vmem:[#allocation2 + $0x40] sm:$0xf]
    %v322 = vpack.c.bf16 %v309, %v308
    %v323 = vpack.c.bf16 %v317, %v315
    %v326 = vunpack.c.l.b16 %v320
    %v327 = vunpack.c.l.b16 %v321
    %v328 = vpack.c.b16 %v327, %v326
    %vm329 = vcmask 261120
    %v331 = vsel %vm329, %v328, 0
    %333 = vmatprep.subr.bf16.mxu0 0
    %334 = vmatpush1.bf16.msra.mxu0 %v322
    %335 = vmatprep.subr.bf16.mxu0 0
    %336 = vmatpush1.bf16.msra.mxu0 %v323
    %337 = vmatprep.subr.bf16.mxu0 0
    %338 = vmatpush1.bf16.msra.mxu0 0
    %339 = vmatprep.subr.bf16.mxu0 0
    %340 = vmatpush1.bf16.msra.mxu0 0
    %341 = vmatprep.subr.bf16.mxu0 0
    %342 = vmatpush1.bf16.msra.mxu0 0
    %343 = vmatprep.subr.bf16.mxu0 0
    %344 = vmatpush1.bf16.msra.mxu0 0
    %345 = vmatprep.subr.bf16.mxu0 0
    %346 = vmatpush1.bf16.msra.mxu0 0
    %347 = vmatprep.subr.bf16.mxu0 0
    %348 = vmatpush1.bf16.msra.mxu0 0
    %349 = vmatprep.subr.bf16.mxu0 0
    %350 = vmatpush1.bf16.msra.mxu0 0
    %351 = vmatprep.subr.bf16.mxu0 0
    %352 = vmatpush1.bf16.msra.mxu0 0
    %353 = vmatprep.subr.bf16.mxu0 0
    %354 = vmatpush1.bf16.msra.mxu0 0
    %355 = vmatprep.subr.bf16.mxu0 0
    %356 = vmatpush1.bf16.msra.mxu0 0
    %357 = vmatprep.subr.bf16.mxu0 0
    %358 = vmatpush1.bf16.msra.mxu0 0
    %359 = vmatprep.subr.bf16.mxu0 0
    %360 = vmatpush1.bf16.msra.mxu0 0
    %361 = vmatprep.subr.bf16.mxu0 0
    %362 = vmatpush1.bf16.msra.mxu0 0
    %363 = vmatprep.subr.bf16.mxu0 0
    %364 = vmatpush1.bf16.msra.mxu0 0
    %365 = vmatprep.mubr.bf16.mxu0 0
    %366 = vmatmul.mubr.bf16.gmra.mrb[0].mxu0 %v331
    %v367 = vpop.f32.mrb[0].mxu0
    %v368 = vadd.f32 0.0, %v367
    %v369 = vpop.f32.mrb[0].mxu0
    %v370 = vpop.f32.mrb[0].mxu0
    %v371 = vadd.f32 0.0, %v370
    %v372 = vpop.f32.mrb[0].mxu0
    %373 = vdwg.mxu0
    %v374 = vpack.c.bf16 %v371, %v368
    %v375 = vld [vmem:[#allocation2 + $0x2c] sm:$0xf]
    %v376 = vld [vmem:[#allocation2 + $0x30] sm:$0x3]
    %v377 = vld [vmem:[#allocation2 + $0x34] sm:$0xf]
    %v378 = vld [vmem:[#allocation2 + $0x38] sm:$0x3]
    %v380 = vrot.slane %v374, 4
    %v383 = vunpack.c.l.b16 %v377
    %v384 = vunpack.c.l.b16 %v378
    %v385 = vpack.c.b16 %v384, %v383
    %vm386 = vcmask 89088
    %v388 = vsel %vm386, %v380, 0
    %vm390 = vcmask 1044480
    %v391 = vsel %vm390, 4294967295, 65535
    %v392 = vsel %vm48, %v391, 0
    %v394 = vand.u32 %v385, %v392
    %396 = vmatprep.subr.bf16.mxu0 0
    %397 = vmatpush1.bf16.msra.mxu0 %v394
    %398 = vmatprep.subr.bf16.mxu0 0
    %399 = vmatpush1.bf16.msra.mxu0 0
    %400 = vmatprep.subr.bf16.mxu0 0
    %401 = vmatpush1.bf16.msra.mxu0 0
    %402 = vmatprep.subr.bf16.mxu0 0
    %403 = vmatpush1.bf16.msra.mxu0 0
    %404 = vmatprep.subr.bf16.mxu0 0
    %405 = vmatpush1.bf16.msra.mxu0 0
    %406 = vmatprep.subr.bf16.mxu0 0
    %407 = vmatpush1.bf16.msra.mxu0 0
    %408 = vmatprep.subr.bf16.mxu0 0
    %409 = vmatpush1.bf16.msra.mxu0 0
    %410 = vmatprep.subr.bf16.mxu0 0
    %411 = vmatpush1.bf16.msra.mxu0 0
    %412 = vmatprep.subr.bf16.mxu0 0
    %413 = vmatpush1.bf16.msra.mxu0 0
    %414 = vmatprep.subr.bf16.mxu0 0
    %415 = vmatpush1.bf16.msra.mxu0 0
    %416 = vmatprep.subr.bf16.mxu0 0
    %417 = vmatpush1.bf16.msra.mxu0 0
    %418 = vmatprep.subr.bf16.mxu0 0
    %419 = vmatpush1.bf16.msra.mxu0 0
    %420 = vmatprep.subr.bf16.mxu0 0
    %421 = vmatpush1.bf16.msra.mxu0 0
    %422 = vmatprep.subr.bf16.mxu0 0
    %423 = vmatpush1.bf16.msra.mxu0 0
    %424 = vmatprep.subr.bf16.mxu0 0
    %425 = vmatpush1.bf16.msra.mxu0 0
    %426 = vmatprep.subr.bf16.mxu0 0
    %427 = vmatpush1.bf16.msra.mxu0 0
    %428 = vmatprep.mubr.bf16.mxu0 0
    %429 = vmatmul.mubr.bf16.gmra.mrb[0].mxu0 %v388
    %v430 = vpop.f32.mrb[0].mxu0
    %v431 = vadd.f32 0.0, %v430
    %v432 = vpop.f32.mrb[0].mxu0
    %v433 = vpop.f32.mrb[0].mxu0
    %v434 = vpop.f32.mrb[0].mxu0
    %435 = vdwg.mxu0
    %v438 = vunpack.c.l.b16 %v375
    %v439 = vunpack.c.l.b16 %v376
    %v440 = vpack.c.b16 %v439, %v438
    %v442 = vsel %vm386, %v374, 0
    %v445 = vand.u32 %v440, %v392
    %447 = vmatprep.subr.bf16.mxu0 0
    %448 = vmatpush1.bf16.msra.mxu0 %v445
    %449 = vmatprep.subr.bf16.mxu0 0
    %450 = vmatpush1.bf16.msra.mxu0 0
    %451 = vmatprep.subr.bf16.mxu0 0
    %452 = vmatpush1.bf16.msra.mxu0 0
    %453 = vmatprep.subr.bf16.mxu0 0
    %454 = vmatpush1.bf16.msra.mxu0 0
    %455 = vmatprep.subr.bf16.mxu0 0
    %456 = vmatpush1.bf16.msra.mxu0 0
    %457 = vmatprep.subr.bf16.mxu0 0
    %458 = vmatpush1.bf16.msra.mxu0 0
    %459 = vmatprep.subr.bf16.mxu0 0
    %460 = vmatpush1.bf16.msra.mxu0 0
    %461 = vmatprep.subr.bf16.mxu0 0
    %462 = vmatpush1.bf16.msra.mxu0 0
    %463 = vmatprep.subr.bf16.mxu0 0
    %464 = vmatpush1.bf16.msra.mxu0 0
    %465 = vmatprep.subr.bf16.mxu0 0
    %466 = vmatpush1.bf16.msra.mxu0 0
    %467 = vmatprep.subr.bf16.mxu0 0
    %468 = vmatpush1.bf16.msra.mxu0 0
    %469 = vmatprep.subr.bf16.mxu0 0
    %470 = vmatpush1.bf16.msra.mxu0 0
    %471 = vmatprep.subr.bf16.mxu0 0
    %472 = vmatpush1.bf16.msra.mxu0 0
    %473 = vmatprep.subr.bf16.mxu0 0
    %474 = vmatpush1.bf16.msra.mxu0 0
    %475 = vmatprep.subr.bf16.mxu0 0
    %476 = vmatpush1.bf16.msra.mxu0 0
    %477 = vmatprep.subr.bf16.mxu0 0
    %478 = vmatpush1.bf16.msra.mxu0 0
    %479 = vmatprep.mubr.bf16.mxu0 0
    %480 = vmatmul.mubr.bf16.gmra.mrb[0].mxu0 %v442
    %v481 = vpop.f32.mrb[0].mxu0
    %v482 = vadd.f32 %v431, %v481
    %v483 = vpop.f32.mrb[0].mxu0
    %v484 = vpop.f32.mrb[0].mxu0
    %v485 = vpop.f32.mrb[0].mxu0
    %486 = vdwg.mxu0
    %v487 = vld [vmem:[%s2 + $0x18] sm:$0xff]
    %v488 = vadd.f32 %v482, %v487
    %v489 = vmax.f32 %v488, 0.0
    %491 = vrot.lane.b32.xlu0 %v489, 127
    %v492 = vpop.permute.xlu0 %491
    %v494 = vld [vmem:[#allocation2 + $0x5c] sm:$0xf]
    %v495 = vld [vmem:[#allocation2 + $0x60] sm:$0xf]
    %v496 = vpack.c.bf16 %v492, %v489
    %v499 = vunpack.c.l.b16 %v494
    %v500 = vunpack.c.l.b16 %v495
    %v501 = vpack.c.b16 %v500, %v499
    %vm502 = vcmask 130048
    %v504 = vsel %vm502, %v501, 0
    %506 = vmatprep.subr.bf16.mxu0 0
    %507 = vmatpush1.bf16.msra.mxu0 %v496
    %508 = vmatprep.subr.bf16.mxu0 0
    %509 = vmatpush1.bf16.msra.mxu0 0
    %510 = vmatprep.subr.bf16.mxu0 0
    %511 = vmatpush1.bf16.msra.mxu0 0
    %512 = vmatprep.subr.bf16.mxu0 0
    %513 = vmatpush1.bf16.msra.mxu0 0
    %514 = vmatprep.subr.bf16.mxu0 0
    %515 = vmatpush1.bf16.msra.mxu0 0
    %516 = vmatprep.subr.bf16.mxu0 0
    %517 = vmatpush1.bf16.msra.mxu0 0
    %518 = vmatprep.subr.bf16.mxu0 0
    %519 = vmatpush1.bf16.msra.mxu0 0
    %520 = vmatprep.subr.bf16.mxu0 0
    %521 = vmatpush1.bf16.msra.mxu0 0
    %522 = vmatprep.subr.bf16.mxu0 0
    %523 = vmatpush1.bf16.msra.mxu0 0
    %524 = vmatprep.subr.bf16.mxu0 0
    %525 = vmatpush1.bf16.msra.mxu0 0
    %526 = vmatprep.subr.bf16.mxu0 0
    %527 = vmatpush1.bf16.msra.mxu0 0
    %528 = vmatprep.subr.bf16.mxu0 0
    %529 = vmatpush1.bf16.msra.mxu0 0
    %530 = vmatprep.subr.bf16.mxu0 0
    %531 = vmatpush1.bf16.msra.mxu0 0
    %532 = vmatprep.subr.bf16.mxu0 0
    %533 = vmatpush1.bf16.msra.mxu0 0
    %534 = vmatprep.subr.bf16.mxu0 0
    %535 = vmatpush1.bf16.msra.mxu0 0
    %536 = vmatprep.subr.bf16.mxu0 0
    %537 = vmatpush1.bf16.msra.mxu0 0
    %538 = vmatprep.mubr.bf16.mxu0 0
    %539 = vmatmul.mubr.bf16.gmra.mrb[0].mxu0 %v504
    %v540 = vpop.f32.mrb[0].mxu0
    %v541 = vadd.f32 0.0, %v540
    %v542 = vpop.f32.mrb[0].mxu0
    %v543 = vpop.f32.mrb[0].mxu0
    %v544 = vadd.f32 0.0, %v543
    %v545 = vpop.f32.mrb[0].mxu0
    %546 = vdwg.mxu0
    %v547 = vpack.c.bf16 %v544, %v541
    %v548 = vld [vmem:[#allocation2 + $0x44] sm:$0xf]
    %v549 = vld [vmem:[#allocation2 + $0x48] sm:$0xf]
    %v550 = vld [vmem:[#allocation2 + $0x4c] sm:$0x7]
    %v551 = vld [vmem:[#allocation2 + $0x50] sm:$0xf]
    %v552 = vld [vmem:[#allocation2 + $0x54] sm:$0xf]
    %v553 = vld [vmem:[#allocation2 + $0x58] sm:$0x7]
    %v555 = vrot.slane %v547, 4
    %v559 = vunpack.c.l.b16 %v551
    %v560 = vunpack.c.l.b16 %v552
    %v561 = vunpack.c.l.b16 %v553
    %v562 = vpack.c.b16 %v560, %v559
    %v563 = vpack.c.b16 %v561, %v561
    %vm565 = vcmask 171008
    %v567 = vsel %vm565, %v555, 0
    %vm569 = vcmask 1041408
    %vm570 = vcmask 1042432
    %v571 = vsel %vm569, 4294967295, 65535
    %v572 = vsel %vm570, %v571, 0
    %v574 = vand.u32 %v563, %v572
    %576 = vmatprep.subr.bf16.mxu0 0
    %577 = vmatpush1.bf16.msra.mxu0 %v562
    %578 = vmatprep.subr.bf16.mxu0 0
    %579 = vmatpush1.bf16.msra.mxu0 %v574
    %580 = vmatprep.subr.bf16.mxu0 0
    %581 = vmatpush1.bf16.msra.mxu0 0
    %582 = vmatprep.subr.bf16.mxu0 0
    %583 = vmatpush1.bf16.msra.mxu0 0
    %584 = vmatprep.subr.bf16.mxu0 0
    %585 = vmatpush1.bf16.msra.mxu0 0
    %586 = vmatprep.subr.bf16.mxu0 0
    %587 = vmatpush1.bf16.msra.mxu0 0
    %588 = vmatprep.subr.bf16.mxu0 0
    %589 = vmatpush1.bf16.msra.mxu0 0
    %590 = vmatprep.subr.bf16.mxu0 0
    %591 = vmatpush1.bf16.msra.mxu0 0
    %592 = vmatprep.subr.bf16.mxu0 0
    %593 = vmatpush1.bf16.msra.mxu0 0
    %594 = vmatprep.subr.bf16.mxu0 0
    %595 = vmatpush1.bf16.msra.mxu0 0
    %596 = vmatprep.subr.bf16.mxu0 0
    %597 = vmatpush1.bf16.msra.mxu0 0
    %598 = vmatprep.subr.bf16.mxu0 0
    %599 = vmatpush1.bf16.msra.mxu0 0
    %600 = vmatprep.subr.bf16.mxu0 0
    %601 = vmatpush1.bf16.msra.mxu0 0
    %602 = vmatprep.subr.bf16.mxu0 0
    %603 = vmatpush1.bf16.msra.mxu0 0
    %604 = vmatprep.subr.bf16.mxu0 0
    %605 = vmatpush1.bf16.msra.mxu0 0
    %606 = vmatprep.subr.bf16.mxu0 0
    %607 = vmatpush1.bf16.msra.mxu0 0
    %608 = vmatprep.mubr.bf16.mxu0 0
    %609 = vmatmul.mubr.bf16.gmra.mrb[0].mxu0 %v567
    %v610 = vpop.f32.mrb[0].mxu0
    %v611 = vadd.f32 0.0, %v610
    %v612 = vpop.f32.mrb[0].mxu0
    %v613 = vpop.f32.mrb[0].mxu0
    %v614 = vpop.f32.mrb[0].mxu0
    %615 = vdwg.mxu0
    %v619 = vunpack.c.l.b16 %v548
    %v620 = vunpack.c.l.b16 %v549
    %v621 = vunpack.c.l.b16 %v550
    %v622 = vpack.c.b16 %v620, %v619
    %v623 = vpack.c.b16 %v621, %v621
    %v626 = vsel %vm565, %v547, 0
    %v629 = vand.u32 %v623, %v572
    %631 = vmatprep.subr.bf16.mxu0 0
    %632 = vmatpush1.bf16.msra.mxu0 %v622
    %633 = vmatprep.subr.bf16.mxu0 0
    %634 = vmatpush1.bf16.msra.mxu0 %v629
    %635 = vmatprep.subr.bf16.mxu0 0
    %636 = vmatpush1.bf16.msra.mxu0 0
    %637 = vmatprep.subr.bf16.mxu0 0
    %638 = vmatpush1.bf16.msra.mxu0 0
    %639 = vmatprep.subr.bf16.mxu0 0
    %640 = vmatpush1.bf16.msra.mxu0 0
    %641 = vmatprep.subr.bf16.mxu0 0
    %642 = vmatpush1.bf16.msra.mxu0 0
    %643 = vmatprep.subr.bf16.mxu0 0
    %644 = vmatpush1.bf16.msra.mxu0 0
    %645 = vmatprep.subr.bf16.mxu0 0
    %646 = vmatpush1.bf16.msra.mxu0 0
    %647 = vmatprep.subr.bf16.mxu0 0
    %648 = vmatpush1.bf16.msra.mxu0 0
    %649 = vmatprep.subr.bf16.mxu0 0
    %650 = vmatpush1.bf16.msra.mxu0 0
    %651 = vmatprep.subr.bf16.mxu0 0
    %652 = vmatpush1.bf16.msra.mxu0 0
    %653 = vmatprep.subr.bf16.mxu0 0
    %654 = vmatpush1.bf16.msra.mxu0 0
    %655 = vmatprep.subr.bf16.mxu0 0
    %656 = vmatpush1.bf16.msra.mxu0 0
    %657 = vmatprep.subr.bf16.mxu0 0
    %658 = vmatpush1.bf16.msra.mxu0 0
    %659 = vmatprep.subr.bf16.mxu0 0
    %660 = vmatpush1.bf16.msra.mxu0 0
    %661 = vmatprep.subr.bf16.mxu0 0
    %662 = vmatpush1.bf16.msra.mxu0 0
    %663 = vmatprep.mubr.bf16.mxu0 0
    %664 = vmatmul.mubr.bf16.gmra.mrb[0].mxu0 %v626
    %v665 = vpop.f32.mrb[0].mxu0
    %v666 = vadd.f32 %v611, %v665
    %v667 = vpop.f32.mrb[0].mxu0
    %v668 = vpop.f32.mrb[0].mxu0
    %v669 = vpop.f32.mrb[0].mxu0
    %670 = vdwg.mxu0
    %v671 = vld [vmem:[%s2 + $0x20] sm:$0xf]
    %v672 = vadd.f32 %v666, %v671
    %vm673 = vcmask 306176
    %674 = vst.msk [vmem:[%s4] sm:$0xf] %vm673, %v672
    // Predicated region
    $region18: #{_lambda_.1} parent=1 // pred_check
      _
    $region19: #{_lambda_.1} parent=1 // pred_check_branch
      %676 = sbr.rel (0) target = $region21
    $region20: #{_lambda_.1} parent=1 // pred_region
      _
    $region21: #{_lambda_.1} parent=1 // pred_fallthru
      _
    // Predicated region
    $region22: #{_lambda_.1} parent=1 // pred_check
      _
    $region23: #{_lambda_.1} parent=1 // pred_check_branch
      %678 = sbr.rel (0) target = $region25
    $region24: #{_lambda_.1} parent=1 // pred_region
      _
    $region25: #{_lambda_.1} parent=1 // pred_fallthru
      _
    // Predicated region
    $region26: #{_lambda_.1} parent=1 // pred_check
      _
    $region27: #{_lambda_.1} parent=1 // pred_check_branch
      %680 = sbr.rel (0) target = $region29
    $region28: #{_lambda_.1} parent=1 // pred_region
      _
    $region29: #{_lambda_.1} parent=1 // pred_fallthru
      _
    // Predicated region
    $region30: #{_lambda_.1} parent=1 // pred_check
      _
    $region31: #{_lambda_.1} parent=1 // pred_check_branch
      %682 = sbr.rel (0) target = $region33
    $region32: #{_lambda_.1} parent=1 // pred_region
      _
    $region33: #{_lambda_.1} parent=1 // pred_fallthru
      _
    %683 = vsyncpa [#allocation3], 1

</llo_original>
